<compile_context>
chip_gen: v7x
topology: tpu7x:2x2x1
jax: 0.10.0
libtpu: 0.0.40
codegen_flags: <defaults>
</compile_context>

<pallas_src>
import functools

import jax
import jax.numpy as jnp
import numpy as np
from jax.experimental import pallas as pl
from jax.experimental.pallas import tpu as pltpu

STD_MAX = 5.0
STD_MIN = 1e-05


def _round_up(x, m):
    return ((x + m - 1) // m) * m


# ----------------------- stage 1: input-side projection ------------------------
def _proj_kernel(x_ref, w1_ref, b1_ref, wih_ref, blstm_ref, gx_ref):
    # fc1 + ReLU (forward always applies relu, regardless of the `relu` flag)
    h1 = jnp.dot(x_ref[...], w1_ref[...], preferred_element_type=jnp.float32) + b1_ref[...]
    h1 = jnp.maximum(h1, 0.0)
    # input-side LSTM matmul + bias, hoisted out of the recurrence
    gx_ref[...] = (jnp.dot(h1, wih_ref[...], preferred_element_type=jnp.float32)
                   + blstm_ref[...])


def _input_projection(x_rows, w1, b1, wih, blstm, *, row_tile):
    n_rows, in_dim = x_rows.shape
    hidden = w1.shape[1]
    grid = (n_rows // row_tile,)
    return pl.pallas_call(
        _proj_kernel,
        grid_spec=pltpu.PrefetchScalarGridSpec(
            num_scalar_prefetch=0,
            grid=grid,
            in_specs=[
                pl.BlockSpec((row_tile, in_dim), lambda r: (r, 0)),        # x rows
                pl.BlockSpec((in_dim, hidden), lambda r: (0, 0)),          # w1
                pl.BlockSpec((1, hidden), lambda r: (0, 0)),               # b1
                pl.BlockSpec((hidden, 4 * hidden), lambda r: (0, 0)),      # wih
                pl.BlockSpec((1, 4 * hidden), lambda r: (0, 0)),           # blstm
            ],
            out_specs=pl.BlockSpec((row_tile, 4 * hidden), lambda r: (r, 0)),
        ),
        out_shape=jax.ShapeDtypeStruct((n_rows, 4 * hidden), jnp.float32),
        compiler_params=pltpu.CompilerParams(dimension_semantics=("parallel",)),
    )(x_rows, w1, b1, wih, blstm)


# ------------------------- stage 2: LSTM recurrence ----------------------------
def _recurrence_kernel(gx_ref, whh_ref, h0_ref, c0_ref,
                       hseq_ref, hT_ref, cT_ref,
                       *, hidden_dim, t_chunk, seq_len, mask_tail):
    # Seed the recurrent state in the resident output blocks at the first chunk.
    @pl.when(pl.program_id(0) == 0)
    def _():
        hT_ref[...] = h0_ref[...]
        cT_ref[...] = c0_ref[...]

    H = hidden_dim
    whh = whh_ref[...]                       # hoist weight load out of the loop
    t_base = pl.program_id(0) * t_chunk

    def step(s, carry):
        h_prev = hT_ref[...]
        c_prev = cT_ref[...]
        # only the hidden-side matmul remains in the serial loop
        gates = gx_ref[s] + jnp.dot(h_prev, whh, preferred_element_type=jnp.float32)
        # PyTorch gate order: i, f, g, o
        i_g = jax.nn.sigmoid(gates[:, 0 * H:1 * H])
        f_g = jax.nn.sigmoid(gates[:, 1 * H:2 * H])
        g_g = jnp.tanh(gates[:, 2 * H:3 * H])
        o_g = jax.nn.sigmoid(gates[:, 3 * H:4 * H])
        c_new = f_g * c_prev + i_g * g_g
        h_new = o_g * jnp.tanh(c_new)
        if mask_tail:  # padded tail timesteps must not advance the state
            valid = (t_base + s) < seq_len
            h_new = jnp.where(valid, h_new, h_prev)
            c_new = jnp.where(valid, c_new, c_prev)
        hT_ref[...] = h_new
        cT_ref[...] = c_new
        hseq_ref[s] = h_new
        return carry

    jax.lax.fori_loop(0, t_chunk, step, 0, unroll=True)


def _lstm_recurrence(gates_tm, whh, h0, c0, *, t_chunk, seq_len):
    T_pad, B_pad, G = gates_tm.shape
    H = whh.shape[0]
    grid = (T_pad // t_chunk,)
    kernel = functools.partial(_recurrence_kernel, hidden_dim=H, t_chunk=t_chunk,
                               seq_len=seq_len, mask_tail=(T_pad != seq_len))
    return pl.pallas_call(
        kernel,
        grid_spec=pltpu.PrefetchScalarGridSpec(
            num_scalar_prefetch=0,
            grid=grid,
            in_specs=[
                pl.BlockSpec((t_chunk, B_pad, G), lambda t: (t, 0, 0)),   # gates_x chunk
                pl.BlockSpec((H, G), lambda t: (0, 0)),                   # whh (resident)
                pl.BlockSpec((B_pad, H), lambda t: (0, 0)),               # h0
                pl.BlockSpec((B_pad, H), lambda t: (0, 0)),               # c0
            ],
            out_specs=[
                pl.BlockSpec((t_chunk, B_pad, H), lambda t: (t, 0, 0)),   # h_t per step
                pl.BlockSpec((B_pad, H), lambda t: (0, 0)),               # h_T (state)
                pl.BlockSpec((B_pad, H), lambda t: (0, 0)),               # c_T (state)
            ],
        ),
        out_shape=[
            jax.ShapeDtypeStruct((T_pad, B_pad, H), jnp.float32),
            jax.ShapeDtypeStruct((B_pad, H), jnp.float32),
            jax.ShapeDtypeStruct((B_pad, H), jnp.float32),
        ],
        compiler_params=pltpu.CompilerParams(dimension_semantics=("arbitrary",)),
    )(gates_tm, whh, h0, c0)


# ----------------------------- stage 3: fc3 head -------------------------------
def _head_kernel(h_ref, w3_ref, b3_ref, mean_ref, std_ref, *, a_dim):
    y = jnp.dot(h_ref[...], w3_ref[...], preferred_element_type=jnp.float32) + b3_ref[...]
    mean_ref[...] = y[:, :a_dim]
    std = jax.nn.sigmoid(y[:, a_dim:]) * STD_MAX
    std_ref[...] = jnp.maximum(std, STD_MIN)


def _output_head(h_rows, w3, b3, *, a_dim, row_tile):
    n_rows, H = h_rows.shape
    grid = (n_rows // row_tile,)
    kernel = functools.partial(_head_kernel, a_dim=a_dim)
    return pl.pallas_call(
        kernel,
        grid_spec=pltpu.PrefetchScalarGridSpec(
            num_scalar_prefetch=0,
            grid=grid,
            in_specs=[
                pl.BlockSpec((row_tile, H), lambda r: (r, 0)),             # h rows
                pl.BlockSpec((H, 2 * a_dim), lambda r: (0, 0)),            # w3
                pl.BlockSpec((1, 2 * a_dim), lambda r: (0, 0)),            # b3
            ],
            out_specs=[
                pl.BlockSpec((row_tile, a_dim), lambda r: (r, 0)),         # mean
                pl.BlockSpec((row_tile, a_dim), lambda r: (r, 0)),         # std
            ],
        ),
        out_shape=[
            jax.ShapeDtypeStruct((n_rows, a_dim), jnp.float32),
            jax.ShapeDtypeStruct((n_rows, a_dim), jnp.float32),
        ],
        compiler_params=pltpu.CompilerParams(dimension_semantics=("parallel",)),
    )(h_rows, w3, b3)


# ------------------------------ host wrapper -----------------------------------
def gaussian_actor_forward(atm1, ot, params, htm1=None, lstm_a=False,
                           t_chunk=16, row_tile=256):
    """Mirrors Gaussian_Actor.forward.  atm1/ot: (B, T, a_dim)/(B, T, o_dim)."""
    a_dim = params["a_dim"]
    o_dim = params["o_dim"]
    H = params["hidden_dim"]
    assert ot.shape[-1] == o_dim
    assert atm1.shape[-1] == a_dim

    input_ = jnp.concatenate((atm1, ot), axis=-1) if lstm_a else ot
    B, T, in_dim = input_.shape
    x = input_.astype(jnp.float32)

    # Pad batch to a full sublane tile (8) -> unmasked loads/stores everywhere.
    B_pad = _round_up(max(B, 8), 8)
    if B_pad != B:
        x = jnp.pad(x, ((0, B_pad - B), (0, 0), (0, 0)))

    # ---- stage 1: fc1 + relu + input-side LSTM matmul for all timesteps at once
    x_rows = jnp.transpose(x, (1, 0, 2)).reshape(T * B_pad, in_dim)  # time-major rows
    n_rows = T * B_pad
    rt = min(row_tile, _round_up(n_rows, 8))
    n_rows_pad = _round_up(n_rows, rt)
    if n_rows_pad != n_rows:
        x_rows = jnp.pad(x_rows, ((0, n_rows_pad - n_rows), (0, 0)))
    gates_rows = _input_projection(x_rows, params["w1"], params["b1"],
                                   params["wih"], params["blstm"], row_tile=rt)
    gates_tm = gates_rows[:n_rows].reshape(T, B_pad, 4 * H)

    # ---- stage 2: the recurrence, T_CHUNK timesteps per (sequential) grid step
    tc = min(t_chunk, T)
    T_pad = _round_up(T, tc)
    if T_pad != T:
        gates_tm = jnp.pad(gates_tm, ((0, T_pad - T), (0, 0), (0, 0)))

    if htm1 is None:
        h0 = jnp.zeros((B_pad, H), jnp.float32)
        c0 = jnp.zeros((B_pad, H), jnp.float32)
    else:
        h0 = htm1[0].reshape(-1, H).astype(jnp.float32)
        c0 = htm1[1].reshape(-1, H).astype(jnp.float32)
        if h0.shape[0] != B_pad:
            h0 = jnp.pad(h0, ((0, B_pad - h0.shape[0]), (0, 0)))
            c0 = jnp.pad(c0, ((0, B_pad - c0.shape[0]), (0, 0)))

    h_seq, hT, cT = _lstm_recurrence(gates_tm, params["whh"], h0, c0,
                                     t_chunk=tc, seq_len=T)

    # ---- stage 3: fc3 -> (mean, sigmoid*STD_MAX clamp) on all rows at once
    h_rows = h_seq[:T].reshape(n_rows, H)
    if n_rows_pad != n_rows:
        h_rows = jnp.pad(h_rows, ((0, n_rows_pad - n_rows), (0, 0)))
    mean_rows, std_rows = _output_head(h_rows, params["w3"], params["b3"],
                                       a_dim=a_dim, row_tile=rt)

    mean = jnp.transpose(mean_rows[:n_rows].reshape(T, B_pad, a_dim)[:, :B], (1, 0, 2))
    std = jnp.transpose(std_rows[:n_rows].reshape(T, B_pad, a_dim)[:, :B], (1, 0, 2))
    ht = (hT[:B][None, :, :], cT[:B][None, :, :])   # (num_layers=1, B, H) like nn.LSTM
    return mean, std, ht


# --------------------------- parameter construction -----------------------------
def make_params(key, a_dim, o_dim, hidden_dim, lstm_a=False):
    input_dim = a_dim + o_dim if lstm_a else o_dim
    ks = jax.random.split(key, 8)

    # kaiming_normal_ on fc weights (fan_in mode, gain sqrt(2)); torch-default
    # uniform(-1/sqrt(fan_in), 1/sqrt(fan_in)) for biases and LSTM weights.
    w1 = jax.random.normal(ks[0], (input_dim, hidden_dim), jnp.float32) * np.sqrt(2.0 / input_dim)
    b1 = jax.random.uniform(ks[1], (1, hidden_dim), jnp.float32,
                            -1.0 / np.sqrt(input_dim), 1.0 / np.sqrt(input_dim))
    lim = 1.0 / np.sqrt(hidden_dim)
    wih = jax.random.uniform(ks[2], (hidden_dim, 4 * hidden_dim), jnp.float32, -lim, lim)
    whh = jax.random.uniform(ks[3], (hidden_dim, 4 * hidden_dim), jnp.float32, -lim, lim)
    b_ih = jax.random.uniform(ks[4], (1, 4 * hidden_dim), jnp.float32, -lim, lim)
    b_hh = jax.random.uniform(ks[5], (1, 4 * hidden_dim), jnp.float32, -lim, lim)
    w3 = jax.random.normal(ks[6], (hidden_dim, 2 * a_dim), jnp.float32) * np.sqrt(2.0 / hidden_dim)
    b3 = jax.random.uniform(ks[7], (1, 2 * a_dim), jnp.float32, -lim, lim)

    return dict(a_dim=a_dim, o_dim=o_dim, hidden_dim=hidden_dim,
                w1=w1, b1=b1, wih=wih, whh=whh, blstm=b_ih + b_hh, w3=w3, b3=b3)


# ------------------------------ pure-JAX reference -------------------------------
def reference_forward(atm1, ot, params, lstm_a=False):
    a_dim, H = params["a_dim"], params["hidden_dim"]
    x = jnp.concatenate((atm1, ot), axis=-1) if lstm_a else ot
    h1 = jax.nn.relu(jnp.einsum("btd,dh->bth", x, params["w1"]) + params["b1"][0])
    B = x.shape[0]

    def step(carry, xt):
        h, c = carry
        g = xt @ params["wih"] + h @ params["whh"] + params["blstm"][0]
        i = jax.nn.sigmoid(g[:, 0 * H:1 * H]); f = jax.nn.sigmoid(g[:, 1 * H:2 * H])
        gg = jnp.tanh(g[:, 2 * H:3 * H]);      o = jax.nn.sigmoid(g[:, 3 * H:4 * H])
        c = f * c + i * gg
        h = o * jnp.tanh(c)
        return (h, c), h

    (hT, cT), hs = jax.lax.scan(step, (jnp.zeros((B, H)), jnp.zeros((B, H))),
                                jnp.transpose(h1, (1, 0, 2)))
    hs = jnp.transpose(hs, (1, 0, 2))
    y = jnp.einsum("bth,hk->btk", hs, params["w3"]) + params["b3"][0]
    mean = y[..., :a_dim]
    std = jnp.maximum(jax.nn.sigmoid(y[..., a_dim:]) * STD_MAX, STD_MIN)
    return mean, std, (hT[None], cT[None])


# ------------------------------------- main --------------------------------------
if __name__ == "__main__":
    B, T = 2, 8
    a_dim, o_dim, hidden_dim = 4, 16, 32

    key = jax.random.PRNGKey(0)
    k_p, k_a, k_o = jax.random.split(key, 3)
    params = make_params(k_p, a_dim, o_dim, hidden_dim, lstm_a=False)

    atm1 = jax.random.normal(k_a, (B, T, a_dim), jnp.float32)
    ot = jax.random.normal(k_o, (B, T, o_dim), jnp.float32)

    mean, std, (hT, cT) = gaussian_actor_forward(atm1, ot, params, htm1=None, lstm_a=False)
    jax.block_until_ready((mean, std, hT, cT))

    # sanity check against the pure-JAX reference
    mean_r, std_r, (hT_r, cT_r) = reference_forward(atm1, ot, params, lstm_a=False)
    np.testing.assert_allclose(np.asarray(mean), np.asarray(mean_r), rtol=1e-2, atol=1e-2)
    np.testing.assert_allclose(np.asarray(std), np.asarray(std_r), rtol=1e-2, atol=1e-2)
    np.testing.assert_allclose(np.asarray(hT), np.asarray(hT_r), rtol=1e-2, atol=1e-2)
    np.testing.assert_allclose(np.asarray(cT), np.asarray(cT_r), rtol=1e-2, atol=1e-2)
    assert mean.shape == (B, T, a_dim) and std.shape == (B, T, a_dim)
    assert hT.shape == (1, B, hidden_dim) and cT.shape == (1, B, hidden_dim)

    print("KERNEL_OK")
</pallas_src>

<mosaic_0001>
module attributes {stable_mosaic.version = 11 : i64} {
  func.func @_proj_kernel(%arg0: i32, %arg1: memref<64x16xf32, #tpu.memory_space<vmem>>, %arg2: memref<16x32xf32, #tpu.memory_space<vmem>>, %arg3: memref<1x32xf32, #tpu.memory_space<vmem>>, %arg4: memref<32x128xf32, #tpu.memory_space<vmem>>, %arg5: memref<1x128xf32, #tpu.memory_space<vmem>>, %arg6: memref<64x128xf32, #tpu.memory_space<vmem>>) attributes {dimension_semantics = [#tpu.dimension_semantics<parallel>], iteration_bounds = array<i64: 1>, scalar_prefetch = 0 : i64, scratch_operands = 0 : i64, tpu.core_type = #tpu.core_type<tc>, window_params = [{transform_indices = @transform_0, window_bounds = array<i64: 64, 16>}, {pipeline_mode = #tpu.pipeline_mode<synchronous>, transform_indices = @transform_1, window_bounds = array<i64: 16, 32>}, {pipeline_mode = #tpu.pipeline_mode<synchronous>, transform_indices = @transform_2, window_bounds = array<i64: 1, 32>}, {pipeline_mode = #tpu.pipeline_mode<synchronous>, transform_indices = @transform_3, window_bounds = array<i64: 32, 128>}, {pipeline_mode = #tpu.pipeline_mode<synchronous>, transform_indices = @transform_4, window_bounds = array<i64: 1, 128>}, {transform_indices = @transform_5, window_bounds = array<i64: 64, 128>}]} {
    %c0 = arith.constant 0 : index
    %c0_0 = arith.constant 0 : index
    %0 = vector.load %arg1[%c0, %c0_0] : memref<64x16xf32, #tpu.memory_space<vmem>>, vector<64x16xf32>
    %c0_1 = arith.constant 0 : index
    %c0_2 = arith.constant 0 : index
    %1 = vector.load %arg2[%c0_1, %c0_2] : memref<16x32xf32, #tpu.memory_space<vmem>>, vector<16x32xf32>
    %cst = arith.constant dense<0.000000e+00> : vector<64x32xf32>
    %2 = tpu.matmul %0, %1, %cst {dimension_numbers = #tpu.dot_dimension_numbers<[1], [0], [0], [1], [0, 0, 1, 1], [], []>} : vector<64x16xf32>, vector<16x32xf32>, vector<64x32xf32> -> vector<64x32xf32>
    %c0_3 = arith.constant 0 : index
    %c0_4 = arith.constant 0 : index
    %3 = vector.load %arg3[%c0_3, %c0_4] : memref<1x32xf32, #tpu.memory_space<vmem>>, vector<1x32xf32>
    %4 = vector.broadcast %3 : vector<1x32xf32> to vector<64x32xf32>
    %5 = arith.addf %2, %4 : vector<64x32xf32>
    %cst_5 = arith.constant 0.000000e+00 : f32
    %6 = vector.broadcast %cst_5 : f32 to vector<64x32xf32>
    %7 = arith.maximumf %5, %6 : vector<64x32xf32>
    %c0_6 = arith.constant 0 : index
    %c0_7 = arith.constant 0 : index
    %8 = vector.load %arg4[%c0_6, %c0_7] : memref<32x128xf32, #tpu.memory_space<vmem>>, vector<32x128xf32>
    %cst_8 = arith.constant dense<0.000000e+00> : vector<64x128xf32>
    %9 = tpu.matmul %7, %8, %cst_8 {dimension_numbers = #tpu.dot_dimension_numbers<[1], [0], [0], [1], [0, 0, 1, 1], [], []>} : vector<64x32xf32>, vector<32x128xf32>, vector<64x128xf32> -> vector<64x128xf32>
    %c0_9 = arith.constant 0 : index
    %c0_10 = arith.constant 0 : index
    %10 = vector.load %arg5[%c0_9, %c0_10] : memref<1x128xf32, #tpu.memory_space<vmem>>, vector<1x128xf32>
    %11 = vector.broadcast %10 : vector<1x128xf32> to vector<64x128xf32>
    %12 = arith.addf %9, %11 : vector<64x128xf32>
    %c0_11 = arith.constant 0 : index
    %c0_12 = arith.constant 0 : index
    %13 = vector.load %arg6[%c0_11, %c0_12] : memref<64x128xf32, #tpu.memory_space<vmem>>, vector<64x128xf32>
    tpu.vector_store %arg6[%c0_11, %c0_12], %12 {strides = array<i32>} : memref<64x128xf32, #tpu.memory_space<vmem>>, vector<64x128xf32>,
    return
  }
  func.func @transform_0(%arg0: i32) -> (i32, i32) {
    %c0_i32 = arith.constant 0 : i32
    %c0_i32_0 = arith.constant 0 : i32
    return %arg0, %c0_i32 : i32, i32
  }
  func.func @transform_1(%arg0: i32) -> (i32, i32) {
    %c0_i32 = arith.constant 0 : i32
    %c0_i32_0 = arith.constant 0 : i32
    %c0_i32_1 = arith.constant 0 : i32
    return %c0_i32, %c0_i32_0 : i32, i32
  }
  func.func @transform_2(%arg0: i32) -> (i32, i32) {
    %c0_i32 = arith.constant 0 : i32
    %c0_i32_0 = arith.constant 0 : i32
    %c0_i32_1 = arith.constant 0 : i32
    return %c0_i32, %c0_i32_0 : i32, i32
  }
  func.func @transform_3(%arg0: i32) -> (i32, i32) {
    %c0_i32 = arith.constant 0 : i32
    %c0_i32_0 = arith.constant 0 : i32
    %c0_i32_1 = arith.constant 0 : i32
    return %c0_i32, %c0_i32_0 : i32, i32
  }
  func.func @transform_4(%arg0: i32) -> (i32, i32) {
    %c0_i32 = arith.constant 0 : i32
    %c0_i32_0 = arith.constant 0 : i32
    %c0_i32_1 = arith.constant 0 : i32
    return %c0_i32, %c0_i32_0 : i32, i32
  }
  func.func @transform_5(%arg0: i32) -> (i32, i32) {
    %c0_i32 = arith.constant 0 : i32
    %c0_i32_0 = arith.constant 0 : i32
    return %arg0, %c0_i32 : i32, i32
  }
}

</mosaic_0001>

<llo_original>
// kernel: tpu_custom_call.1
$region0: #{tpu_custom_call.1}
  #allocation0 [shape = 'u32[]', space=smem, size = 0x4, offset = 0x4, fixed_abs, tag = 'smem constant byte address 0x4 - core index']
  #allocation1 [shape = 'u32[144,128]{1,0:T(1,128)}', space=vmem, size = 0x12000, scoped, tag = 'internal scratch']
  %s0 = inlined_call_operand.vmem [shape: f32[64,16], index: 0, kind: input, shape index: {}]
  %s1 = inlined_call_operand.vmem [shape: f32[16,32], index: 1, kind: input, shape index: {}]
  %s2 = inlined_call_operand.vmem [shape: f32[1,32], index: 2, kind: input, shape index: {}]
  %s3 = inlined_call_operand.vmem [shape: f32[32,128], index: 3, kind: input, shape index: {}]
  %s4 = inlined_call_operand.vmem [shape: f32[1,128], index: 4, kind: input, shape index: {}]
  %s5 = inlined_call_operand.hbm [shape: f32[64,128], index: 5, kind: output, shape index: {}]
  %s6 = sld [smem:[#allocation0]]
  $region30: #{tpu_custom_call.1} parent=0
    _
  %s8 = ssub.s32 1, %s6
  %s9 = scalar_select 0, %s8, %s6
  $region1: #{tpu_custom_call.1} parent=0
    #allocation2 [shape = 'u8[32768]{0}', space=vmem, size = 0x8000, scoped, tag = 'output window, operand 0, single buffered']
    #allocation3 [shape = 's32[1]{0}', space=sflag, size = 0x4, scoped, tag = 'scoped memory for tpu_custom_call.1']
    %10 = vsyncpa [#allocation3], 0
    // Predicated region
    $region2: #{tpu_custom_call.1} parent=1 // pred_check
      _
    $region3: #{tpu_custom_call.1} parent=1 // pred_check_branch
      %12 = sbr.rel (0) target = $region5
    $region4: #{tpu_custom_call.1} parent=1 // pred_region
      _
    $region5: #{tpu_custom_call.1} parent=1 // pred_fallthru
      _
    // Predicated region
    $region6: #{tpu_custom_call.1} parent=1 // pred_check
      _
    $region7: #{tpu_custom_call.1} parent=1 // pred_check_branch
      %14 = sbr.rel (0) target = $region9
    $region8: #{tpu_custom_call.1} parent=1 // pred_region
      _
    $region9: #{tpu_custom_call.1} parent=1 // pred_fallthru
      _
    // Predicated region
    $region10: #{tpu_custom_call.1} parent=1 // pred_check
      _
    $region11: #{tpu_custom_call.1} parent=1 // pred_check_branch
      %16 = sbr.rel (0) target = $region13
    $region12: #{tpu_custom_call.1} parent=1 // pred_region
      _
    $region13: #{tpu_custom_call.1} parent=1 // pred_fallthru
      _
    // Predicated region
    $region14: #{tpu_custom_call.1} parent=1 // pred_check
      _
    $region15: #{tpu_custom_call.1} parent=1 // pred_check_branch
      %18 = sbr.rel (0) target = $region17
    $region16: #{tpu_custom_call.1} parent=1 // pred_region
      _
    $region17: #{tpu_custom_call.1} parent=1 // pred_fallthru
      _
    // Predicated region
    $region18: #{tpu_custom_call.1} parent=1 // pred_check
      _
    $region19: #{tpu_custom_call.1} parent=1 // pred_check_branch
      %20 = sbr.rel (0) target = $region21
    $region20: #{tpu_custom_call.1} parent=1 // pred_region
      _
    $region21: #{tpu_custom_call.1} parent=1 // pred_fallthru
      _
    %v21 = vld [vmem:[%s0] sm:$0xff]
    %v22 = vld [vmem:[%s0 + $0x8] sm:$0xff]
    %v23 = vld [vmem:[%s0 + $0x10] sm:$0xff]
    %v24 = vld [vmem:[%s0 + $0x18] sm:$0xff]
    %v25 = vld [vmem:[%s0 + $0x20] sm:$0xff]
    %v26 = vld [vmem:[%s0 + $0x28] sm:$0xff]
    %v27 = vld [vmem:[%s0 + $0x30] sm:$0xff]
    %v28 = vld [vmem:[%s0 + $0x38] sm:$0xff]
    %v29 = vld [vmem:[%s1] sm:$0xff]
    %v30 = vld [vmem:[%s1 + $0x8] sm:$0xff]
    %v31 = vld [vmem:[%s2] sm:$0x1]
    %v33 = vlaneseq
    %v34 = vshrl.u32 %v33, 7
    %v35 = vsub.s32 0, %v34
    %v36 = vrot.slane %v31, %v35
    %vm38 = vcmask 130048
    %v40 = vsel %vm38, %v21, 0
    %v43 = vsel %vm38, %v22, 0
    %v46 = vsel %vm38, %v23, 0
    %v49 = vsel %vm38, %v24, 0
    %v52 = vsel %vm38, %v25, 0
    %v55 = vsel %vm38, %v26, 0
    %v58 = vsel %vm38, %v27, 0
    %v61 = vsel %vm38, %v28, 0
    %63 = vmatprep.subr.mxu0 0.0
    %64 = vmatpush1.msra.mxu0 %v29
    %65 = vmatprep.subr.mxu0 0.0
    %66 = vmatpush1.msra.mxu0 %v30
    %67 = vmatprep.subr.mxu0 0.0
    %68 = vmatpush1.msra.mxu0 0.0
    %69 = vmatprep.subr.mxu0 0.0
    %70 = vmatpush1.msra.mxu0 0.0
    %71 = vmatprep.subr.mxu0 0.0
    %72 = vmatpush1.msra.mxu0 0.0
    %73 = vmatprep.subr.mxu0 0.0
    %74 = vmatpush1.msra.mxu0 0.0
    %75 = vmatprep.subr.mxu0 0.0
    %76 = vmatpush1.msra.mxu0 0.0
    %77 = vmatprep.subr.mxu0 0.0
    %78 = vmatpush1.msra.mxu0 0.0
    %79 = vmatprep.subr.mxu0 0.0
    %80 = vmatpush1.msra.mxu0 0.0
    %81 = vmatprep.subr.mxu0 0.0
    %82 = vmatpush1.msra.mxu0 0.0
    %83 = vmatprep.subr.mxu0 0.0
    %84 = vmatpush1.msra.mxu0 0.0
    %85 = vmatprep.subr.mxu0 0.0
    %86 = vmatpush1.msra.mxu0 0.0
    %87 = vmatprep.subr.mxu0 0.0
    %88 = vmatpush1.msra.mxu0 0.0
    %89 = vmatprep.subr.mxu0 0.0
    %90 = vmatpush1.msra.mxu0 0.0
    %91 = vmatprep.subr.mxu0 0.0
    %92 = vmatpush1.msra.mxu0 0.0
    %93 = vmatprep.subr.mxu0 0.0
    %94 = vmatpush1.msra.mxu0 0.0
    %95 = vmatprep.subr.mxu0 0.0
    %96 = vmatpush1.msra.mxu0 0.0
    %97 = vmatprep.subr.mxu0 0.0
    %98 = vmatpush1.msra.mxu0 0.0
    %99 = vmatprep.subr.mxu0 0.0
    %100 = vmatpush1.msra.mxu0 0.0
    %101 = vmatprep.subr.mxu0 0.0
    %102 = vmatpush1.msra.mxu0 0.0
    %103 = vmatprep.subr.mxu0 0.0
    %104 = vmatpush1.msra.mxu0 0.0
    %105 = vmatprep.subr.mxu0 0.0
    %106 = vmatpush1.msra.mxu0 0.0
    %107 = vmatprep.subr.mxu0 0.0
    %108 = vmatpush1.msra.mxu0 0.0
    %109 = vmatprep.subr.mxu0 0.0
    %110 = vmatpush1.msra.mxu0 0.0
    %111 = vmatprep.subr.mxu0 0.0
    %112 = vmatpush1.msra.mxu0 0.0
    %113 = vmatprep.subr.mxu0 0.0
    %114 = vmatpush1.msra.mxu0 0.0
    %115 = vmatprep.subr.mxu0 0.0
    %116 = vmatpush1.msra.mxu0 0.0
    %117 = vmatprep.subr.mxu0 0.0
    %118 = vmatpush1.msra.mxu0 0.0
    %119 = vmatprep.subr.mxu0 0.0
    %120 = vmatpush1.msra.mxu0 0.0
    %121 = vmatprep.subr.mxu0 0.0
    %122 = vmatpush1.msra.mxu0 0.0
    %123 = vmatprep.subr.mxu0 0.0
    %124 = vmatpush1.msra.mxu0 0.0
    %125 = vmatprep.subr.mxu0 0.0
    %126 = vmatpush1.msra.mxu0 0.0
    %127 = vmatprep.mubr.f32.mxu0 0.0
    %128 = vmatmul.mubr.f32.gmra.mrb[0].mxu0 %v40
    %v129 = vpop.f32.mrb[0].mxu0
    %v130 = vadd.f32 %v36, %v129
    %v131 = vpop.f32.mrb[0].mxu0
    %132 = vmatprep.mubr.f32.mxu0 0.0
    %133 = vmatmul.mubr.f32.gmra.mrb[0].mxu0 %v43
    %v134 = vpop.f32.mrb[0].mxu0
    %v135 = vadd.f32 %v36, %v134
    %v136 = vpop.f32.mrb[0].mxu0
    %137 = vmatprep.mubr.f32.mxu0 0.0
    %138 = vmatmul.mubr.f32.gmra.mrb[0].mxu0 %v46
    %v139 = vpop.f32.mrb[0].mxu0
    %v140 = vadd.f32 %v36, %v139
    %v141 = vpop.f32.mrb[0].mxu0
    %142 = vmatprep.mubr.f32.mxu0 0.0
    %143 = vmatmul.mubr.f32.gmra.mrb[0].mxu0 %v49
    %v144 = vpop.f32.mrb[0].mxu0
    %v145 = vadd.f32 %v36, %v144
    %v146 = vpop.f32.mrb[0].mxu0
    %147 = vmatprep.mubr.f32.mxu0 0.0
    %148 = vmatmul.mubr.f32.gmra.mrb[0].mxu0 %v52
    %v149 = vpop.f32.mrb[0].mxu0
    %v150 = vadd.f32 %v36, %v149
    %v151 = vpop.f32.mrb[0].mxu0
    %152 = vmatprep.mubr.f32.mxu0 0.0
    %153 = vmatmul.mubr.f32.gmra.mrb[0].mxu0 %v55
    %v154 = vpop.f32.mrb[0].mxu0
    %v155 = vadd.f32 %v36, %v154
    %v156 = vpop.f32.mrb[0].mxu0
    %157 = vmatprep.mubr.f32.mxu0 0.0
    %158 = vmatmul.mubr.f32.gmra.mrb[0].mxu0 %v58
    %v159 = vpop.f32.mrb[0].mxu0
    %v160 = vadd.f32 %v36, %v159
    %v161 = vpop.f32.mrb[0].mxu0
    %162 = vmatprep.mubr.f32.mxu0 0.0
    %163 = vmatmul.mubr.f32.gmra.mrb[0].mxu0 %v61
    %v164 = vpop.f32.mrb[0].mxu0
    %v165 = vadd.f32 %v36, %v164
    %v166 = vpop.f32.mrb[0].mxu0
    %167 = vdwg.mxu0
    %v168 = vmax.f32 %v130, 0.0
    %v169 = vmax.f32 %v135, 0.0
    %v170 = vmax.f32 %v140, 0.0
    %v171 = vmax.f32 %v145, 0.0
    %v172 = vmax.f32 %v150, 0.0
    %v173 = vmax.f32 %v155, 0.0
    %v174 = vmax.f32 %v160, 0.0
    %v175 = vmax.f32 %v165, 0.0
    %v176 = vld [vmem:[%s3] sm:$0xff]
    %v177 = vld [vmem:[%s3 + $0x8] sm:$0xff]
    %v178 = vld [vmem:[%s3 + $0x10] sm:$0xff]
    %v179 = vld [vmem:[%s3 + $0x18] sm:$0xff]
    %v180 = vld [vmem:[%s4] sm:$0x1]
    %v182 = vlaneseq
    %v183 = vshrl.u32 %v182, 7
    %v184 = vsub.s32 0, %v183
    %v185 = vrot.slane %v180, %v184
    %vm187 = vcmask 261120
    %v189 = vsel %vm187, %v168, 0
    %v192 = vsel %vm187, %v169, 0
    %v195 = vsel %vm187, %v170, 0
    %v198 = vsel %vm187, %v171, 0
    %v201 = vsel %vm187, %v172, 0
    %v204 = vsel %vm187, %v173, 0
    %v207 = vsel %vm187, %v174, 0
    %v210 = vsel %vm187, %v175, 0
    %212 = vmatprep.subr.mxu0 0.0
    %213 = vmatpush1.msra.mxu0 %v176
    %214 = vmatprep.subr.mxu0 0.0
    %215 = vmatpush1.msra.mxu0 %v177
    %216 = vmatprep.subr.mxu0 0.0
    %217 = vmatpush1.msra.mxu0 %v178
    %218 = vmatprep.subr.mxu0 0.0
    %219 = vmatpush1.msra.mxu0 %v179
    %220 = vmatprep.subr.mxu0 0.0
    %221 = vmatpush1.msra.mxu0 0.0
    %222 = vmatprep.subr.mxu0 0.0
    %223 = vmatpush1.msra.mxu0 0.0
    %224 = vmatprep.subr.mxu0 0.0
    %225 = vmatpush1.msra.mxu0 0.0
    %226 = vmatprep.subr.mxu0 0.0
    %227 = vmatpush1.msra.mxu0 0.0
    %228 = vmatprep.subr.mxu0 0.0
    %229 = vmatpush1.msra.mxu0 0.0
    %230 = vmatprep.subr.mxu0 0.0
    %231 = vmatpush1.msra.mxu0 0.0
    %232 = vmatprep.subr.mxu0 0.0
    %233 = vmatpush1.msra.mxu0 0.0
    %234 = vmatprep.subr.mxu0 0.0
    %235 = vmatpush1.msra.mxu0 0.0
    %236 = vmatprep.subr.mxu0 0.0
    %237 = vmatpush1.msra.mxu0 0.0
    %238 = vmatprep.subr.mxu0 0.0
    %239 = vmatpush1.msra.mxu0 0.0
    %240 = vmatprep.subr.mxu0 0.0
    %241 = vmatpush1.msra.mxu0 0.0
    %242 = vmatprep.subr.mxu0 0.0
    %243 = vmatpush1.msra.mxu0 0.0
    %244 = vmatprep.subr.mxu0 0.0
    %245 = vmatpush1.msra.mxu0 0.0
    %246 = vmatprep.subr.mxu0 0.0
    %247 = vmatpush1.msra.mxu0 0.0
    %248 = vmatprep.subr.mxu0 0.0
    %249 = vmatpush1.msra.mxu0 0.0
    %250 = vmatprep.subr.mxu0 0.0
    %251 = vmatpush1.msra.mxu0 0.0
    %252 = vmatprep.subr.mxu0 0.0
    %253 = vmatpush1.msra.mxu0 0.0
    %254 = vmatprep.subr.mxu0 0.0
    %255 = vmatpush1.msra.mxu0 0.0
    %256 = vmatprep.subr.mxu0 0.0
    %257 = vmatpush1.msra.mxu0 0.0
    %258 = vmatprep.subr.mxu0 0.0
    %259 = vmatpush1.msra.mxu0 0.0
    %260 = vmatprep.subr.mxu0 0.0
    %261 = vmatpush1.msra.mxu0 0.0
    %262 = vmatprep.subr.mxu0 0.0
    %263 = vmatpush1.msra.mxu0 0.0
    %264 = vmatprep.subr.mxu0 0.0
    %265 = vmatpush1.msra.mxu0 0.0
    %266 = vmatprep.subr.mxu0 0.0
    %267 = vmatpush1.msra.mxu0 0.0
    %268 = vmatprep.subr.mxu0 0.0
    %269 = vmatpush1.msra.mxu0 0.0
    %270 = vmatprep.subr.mxu0 0.0
    %271 = vmatpush1.msra.mxu0 0.0
    %272 = vmatprep.subr.mxu0 0.0
    %273 = vmatpush1.msra.mxu0 0.0
    %274 = vmatprep.subr.mxu0 0.0
    %275 = vmatpush1.msra.mxu0 0.0
    %276 = vmatprep.mubr.f32.mxu0 0.0
    %277 = vmatmul.mubr.f32.gmra.mrb[0].mxu0 %v189
    %v278 = vpop.f32.mrb[0].mxu0
    %v279 = vadd.f32 %v185, %v278
    %v280 = vpop.f32.mrb[0].mxu0
    %281 = vmatprep.mubr.f32.mxu0 0.0
    %282 = vmatmul.mubr.f32.gmra.mrb[0].mxu0 %v192
    %v283 = vpop.f32.mrb[0].mxu0
    %v284 = vadd.f32 %v185, %v283
    %v285 = vpop.f32.mrb[0].mxu0
    %286 = vmatprep.mubr.f32.mxu0 0.0
    %287 = vmatmul.mubr.f32.gmra.mrb[0].mxu0 %v195
    %v288 = vpop.f32.mrb[0].mxu0
    %v289 = vadd.f32 %v185, %v288
    %v290 = vpop.f32.mrb[0].mxu0
    %291 = vmatprep.mubr.f32.mxu0 0.0
    %292 = vmatmul.mubr.f32.gmra.mrb[0].mxu0 %v198
    %v293 = vpop.f32.mrb[0].mxu0
    %v294 = vadd.f32 %v185, %v293
    %v295 = vpop.f32.mrb[0].mxu0
    %296 = vmatprep.mubr.f32.mxu0 0.0
    %297 = vmatmul.mubr.f32.gmra.mrb[0].mxu0 %v201
    %v298 = vpop.f32.mrb[0].mxu0
    %v299 = vadd.f32 %v185, %v298
    %v300 = vpop.f32.mrb[0].mxu0
    %301 = vmatprep.mubr.f32.mxu0 0.0
    %302 = vmatmul.mubr.f32.gmra.mrb[0].mxu0 %v204
    %v303 = vpop.f32.mrb[0].mxu0
    %v304 = vadd.f32 %v185, %v303
    %v305 = vpop.f32.mrb[0].mxu0
    %306 = vmatprep.mubr.f32.mxu0 0.0
    %307 = vmatmul.mubr.f32.gmra.mrb[0].mxu0 %v207
    %v308 = vpop.f32.mrb[0].mxu0
    %v309 = vadd.f32 %v185, %v308
    %v310 = vpop.f32.mrb[0].mxu0
    %311 = vmatprep.mubr.f32.mxu0 0.0
    %312 = vmatmul.mubr.f32.gmra.mrb[0].mxu0 %v210
    %v313 = vpop.f32.mrb[0].mxu0
    %v314 = vadd.f32 %v185, %v313
    %v315 = vpop.f32.mrb[0].mxu0
    %316 = vdwg.mxu0
    %317 = vst [vmem:[#allocation2] sm:$0xff] %v279
    %318 = vst [vmem:[#allocation2 + $0x8] sm:$0xff] %v284
    %319 = vst [vmem:[#allocation2 + $0x10] sm:$0xff] %v289
    %320 = vst [vmem:[#allocation2 + $0x18] sm:$0xff] %v294
    %321 = vst [vmem:[#allocation2 + $0x20] sm:$0xff] %v299
    %322 = vst [vmem:[#allocation2 + $0x28] sm:$0xff] %v304
    %323 = vst [vmem:[#allocation2 + $0x30] sm:$0xff] %v309
    %324 = vst [vmem:[#allocation2 + $0x38] sm:$0xff] %v314
    // Predicated region
    $region22: #{tpu_custom_call.1} parent=1 // pred_check
      _
    $region23: #{tpu_custom_call.1} parent=1 // pred_check_branch
      %326 = sbr.rel (0) target = $region25
    $region24: #{tpu_custom_call.1} parent=1 // pred_region
      %s328 = ssub.s32 1024, 1024
      %329 = vsyncadd [#allocation3], %s328
      %s330 = sshll.u32 [#allocation2], 4
      %s331 = int_to_ptr.vmem [resolvable:$true] %s330
      %336 = dma.vmem_to_hbm [thread:$0]  %s331, 1024, %s5, [#allocation3], 128, 128, 8
    $region25: #{tpu_custom_call.1} parent=1 // pred_fallthru
      _
    // Predicated region
    $region26: #{tpu_custom_call.1} parent=1 // pred_check
      _
    $region27: #{tpu_custom_call.1} parent=1 // pred_check_branch
      %338 = sbr.rel (0) target = $region29
    $region28: #{tpu_custom_call.1} parent=1 // pred_region
      %339 = dma.done [#allocation3], 1024
    $region29: #{tpu_custom_call.1} parent=1 // pred_fallthru
      _
    %340 = vsyncpa [#allocation3], 1

</llo_original>
